<compile_context>
chip_gen: v5e
topology: v5e:2x2
jax: 0.10.0
libtpu: 0.0.40
codegen_flags: <defaults>
</compile_context>

<pallas_src>
import jax
import jax.numpy as jnp
from jax.experimental import pallas as pl
from jax.experimental.pallas import tpu as pltpu

_COORD_PAD = 8  # pad the (coords + phase) contraction dim to one sublane group


def _round_up(x, m):
    return ((x + m - 1) // m) * m


def _pose_coef_table(in_dim, out_dim, alpha, beta):
    """[out_dim, 8] table.

    Columns 0..in_dim-1 hold beta / alpha^(f/fd) on the coordinate that feeds
    each output channel (zero elsewhere); column `in_dim` holds the phase
    (0 for sin channels, pi/2 for cos channels, since cos(t) = sin(t + pi/2)).
    Remaining columns are zero padding up to 8.
    """
    fd = out_dim // (in_dim * 2)
    freq = jnp.arange(fd, dtype=jnp.float32)
    inv = beta * jnp.power(jnp.float32(alpha), -freq / fd)  # beta / alpha^(f/fd)
    coef = jnp.zeros((out_dim, _COORD_PAD), jnp.float32)
    for c in range(in_dim):
        base = c * 2 * fd
        coef = coef.at[base:base + fd, c].set(inv)                    # sin half
        coef = coef.at[base + fd:base + 2 * fd, c].set(inv)           # cos half
        coef = coef.at[base + fd:base + 2 * fd, in_dim].set(jnp.pi / 2)
    return coef


def _pose_geo_kernel(coef_ref, xyz_ref, x_ref, o_ref):
    # coef_ref: [C, 8]          per-channel coordinate coefficients + phase col
    # xyz_ref : [1, 8, GKpad]   rows 0..in_dim-1 coords, next row ones, rest 0
    # x_ref   : [1, C, GKpad]   knn features (channels-first, lane dim = G*K)
    # o_ref   : [1, C, GKpad]
    t = jnp.dot(coef_ref[...], xyz_ref[0], preferred_element_type=jnp.float32)
    o_ref[0] = x_ref[0] + jnp.sin(t)


def pose_geo(knn_xyz, knn_x, *, alpha, beta):
    """knn_xyz: [B, in_dim, G, K], knn_x: [B, out_dim, G, K] -> [B, out_dim, G, K]."""
    B, in_dim, G, K = knn_xyz.shape
    out_dim = knn_x.shape[1]
    assert out_dim % (in_dim * 2) == 0, "out_dim must be divisible by 2*in_dim"
    assert in_dim + 1 <= _COORD_PAD

    gk = G * K
    gk_pad = _round_up(gk, 128)  # lane-dense (unmasked) stores

    xyz = knn_xyz.reshape(B, in_dim, gk).astype(jnp.float32)
    x = knn_x.reshape(B, out_dim, gk).astype(jnp.float32)
    if gk_pad != gk:
        pad = ((0, 0), (0, 0), (0, gk_pad - gk))
        xyz = jnp.pad(xyz, pad)
        x = jnp.pad(x, pad)

    # Coordinates padded to 8 rows: a row of ones carries the phase column of
    # the coefficient table through the same matmul; remaining rows are zero.
    ones = jnp.ones((B, 1, gk_pad), jnp.float32)
    zeros = jnp.zeros((B, _COORD_PAD - in_dim - 1, gk_pad), jnp.float32)
    xyz8 = jnp.concatenate([xyz, ones, zeros], axis=1)

    coef = _pose_coef_table(in_dim, out_dim, alpha, beta)

    out = pl.pallas_call(
        _pose_geo_kernel,
        out_shape=jax.ShapeDtypeStruct((B, out_dim, gk_pad), jnp.float32),
        grid=(B,),
        in_specs=[
            pl.BlockSpec((out_dim, _COORD_PAD), lambda b: (0, 0)),
            pl.BlockSpec((1, _COORD_PAD, gk_pad), lambda b: (b, 0, 0)),
            pl.BlockSpec((1, out_dim, gk_pad), lambda b: (b, 0, 0)),
        ],
        out_specs=pl.BlockSpec((1, out_dim, gk_pad), lambda b: (b, 0, 0)),
        compiler_params=pltpu.CompilerParams(dimension_semantics=("parallel",)),
    )(coef, xyz8, x)

    return out[:, :, :gk].reshape(B, out_dim, G, K)


def pose_geo_reference(knn_xyz, knn_x, *, alpha, beta):
    """Direct jnp transcription of the PyTorch module, for validation."""
    B, in_dim, G, K = knn_xyz.shape
    out_dim = knn_x.shape[1]
    fd = out_dim // (in_dim * 2)
    feat_range = jnp.arange(fd, dtype=jnp.float32)
    dim_embed = jnp.power(jnp.float32(alpha), feat_range / fd)
    div_embed = (beta * knn_xyz[..., None]) / dim_embed          # [B,in,G,K,fd]
    pe = jnp.concatenate([jnp.sin(div_embed), jnp.cos(div_embed)], axis=-1)
    pe = jnp.transpose(pe, (0, 1, 4, 2, 3)).reshape(B, out_dim, G, K)
    return knn_x + pe


if __name__ == "__main__":
    B, in_dim, out_dim = 2, 3, 48
    G, K = 16, 8                      # G*K = 128 -> lane-dense with no padding
    alpha, beta = 1000.0, 100.0

    key = jax.random.PRNGKey(0)
    kxyz, kx = jax.random.split(key)
    # Local (relative) neighbor coordinates have modest magnitude in Point-PN.
    knn_xyz = 0.1 * jax.random.normal(kxyz, (B, in_dim, G, K), jnp.float32)
    knn_x = jax.random.normal(kx, (B, out_dim, G, K), jnp.float32)

    out = pose_geo(knn_xyz, knn_x, alpha=alpha, beta=beta)
    jax.block_until_ready(out)

    ref = pose_geo_reference(knn_xyz, knn_x, alpha=alpha, beta=beta)
    assert out.shape == (B, out_dim, G, K)
    assert bool(jnp.all(jnp.isfinite(out)))
    # cos computed as sin(t + pi/2): allow tiny transcendental/rounding drift.
    assert float(jnp.max(jnp.abs(out - ref))) < 2e-3
    print("KERNEL_OK")
</pallas_src>

<mosaic_0001>
module attributes {stable_mosaic.version = 11 : i64} {
  func.func @_pose_geo_kernel(%arg0: i32, %arg1: memref<48x8xf32, #tpu.memory_space<vmem>>, %arg2: memref<1x8x128xf32, #tpu.memory_space<vmem>>, %arg3: memref<1x48x128xf32, #tpu.memory_space<vmem>>, %arg4: memref<1x48x128xf32, #tpu.memory_space<vmem>>) attributes {dimension_semantics = [#tpu.dimension_semantics<parallel>], iteration_bounds = array<i64: 2>, scalar_prefetch = 0 : i64, scratch_operands = 0 : i64, tpu.core_type = #tpu.core_type<tc>, window_params = [{pipeline_mode = #tpu.pipeline_mode<synchronous>, transform_indices = @transform_0, window_bounds = array<i64: 48, 8>}, {transform_indices = @transform_1, window_bounds = array<i64: 1, 8, 128>}, {transform_indices = @transform_2, window_bounds = array<i64: 1, 48, 128>}, {transform_indices = @transform_3, window_bounds = array<i64: 1, 48, 128>}]} {
    %c0 = arith.constant 0 : index
    %c0_0 = arith.constant 0 : index
    %0 = vector.load %arg1[%c0, %c0_0] : memref<48x8xf32, #tpu.memory_space<vmem>>, vector<48x8xf32>
    %c0_1 = arith.constant 0 : index
    %c0_2 = arith.constant 0 : index
    %c0_3 = arith.constant 0 : index
    %1 = vector.load %arg2[%c0_1, %c0_2, %c0_3] : memref<1x8x128xf32, #tpu.memory_space<vmem>>, vector<1x8x128xf32>
    %2 = vector.shape_cast %1 : vector<1x8x128xf32> to vector<8x128xf32>
    %cst = arith.constant dense<0.000000e+00> : vector<48x128xf32>
    %3 = tpu.matmul %0, %2, %cst {dimension_numbers = #tpu.dot_dimension_numbers<[1], [0], [0], [1], [0, 0, 1, 1], [], []>} : vector<48x8xf32>, vector<8x128xf32>, vector<48x128xf32> -> vector<48x128xf32>
    %c0_4 = arith.constant 0 : index
    %c0_5 = arith.constant 0 : index
    %c0_6 = arith.constant 0 : index
    %4 = vector.load %arg3[%c0_4, %c0_5, %c0_6] : memref<1x48x128xf32, #tpu.memory_space<vmem>>, vector<1x48x128xf32>
    %5 = vector.shape_cast %4 : vector<1x48x128xf32> to vector<48x128xf32>
    %6 = math.sin %3 : vector<48x128xf32>
    %7 = arith.addf %5, %6 : vector<48x128xf32>
    %c0_7 = arith.constant 0 : index
    %c0_8 = arith.constant 0 : index
    %c0_9 = arith.constant 0 : index
    %8 = vector.load %arg4[%c0_7, %c0_8, %c0_9] : memref<1x48x128xf32, #tpu.memory_space<vmem>>, vector<1x48x128xf32>
    %9 = vector.shape_cast %8 : vector<1x48x128xf32> to vector<48x128xf32>
    %10 = vector.shape_cast %7 : vector<48x128xf32> to vector<1x48x128xf32>
    tpu.vector_store %arg4[%c0_7, %c0_8, %c0_9], %10 {strides = array<i32>} : memref<1x48x128xf32, #tpu.memory_space<vmem>>, vector<1x48x128xf32>,
    return
  }
  func.func @transform_0(%arg0: i32) -> (i32, i32) {
    %c0_i32 = arith.constant 0 : i32
    %c0_i32_0 = arith.constant 0 : i32
    %c0_i32_1 = arith.constant 0 : i32
    return %c0_i32, %c0_i32_0 : i32, i32
  }
  func.func @transform_1(%arg0: i32) -> (i32, i32, i32) {
    %c0_i32 = arith.constant 0 : i32
    %c0_i32_0 = arith.constant 0 : i32
    %c0_i32_1 = arith.constant 0 : i32
    return %arg0, %c0_i32, %c0_i32_0 : i32, i32, i32
  }
  func.func @transform_2(%arg0: i32) -> (i32, i32, i32) {
    %c0_i32 = arith.constant 0 : i32
    %c0_i32_0 = arith.constant 0 : i32
    %c0_i32_1 = arith.constant 0 : i32
    return %arg0, %c0_i32, %c0_i32_0 : i32, i32, i32
  }
  func.func @transform_3(%arg0: i32) -> (i32, i32, i32) {
    %c0_i32 = arith.constant 0 : i32
    %c0_i32_0 = arith.constant 0 : i32
    %c0_i32_1 = arith.constant 0 : i32
    return %arg0, %c0_i32, %c0_i32_0 : i32, i32, i32
  }
}

</mosaic_0001>

<llo_original>
// kernel: tpu_custom_call.1
$region0: #{tpu_custom_call.1}
  #allocation0 [shape = 'u32[]', space=smem, size = 0x4, offset = 0x4, fixed_abs, tag = 'smem constant byte address 0x4 - core index']
  #allocation1 [shape = 'u32[72,128]{1,0:T(1,128)}', space=vmem, size = 0x9000, scoped, tag = 'internal scratch']
  %s0 = inlined_call_operand.vmem [shape: f32[48,8], index: 0, kind: input, shape index: {}]
  %s1 = inlined_call_operand.vmem [shape: f32[2,8,128], index: 1, kind: input, shape index: {}]
  %s2 = inlined_call_operand.hbm [shape: f32[2,48,128], index: 2, kind: input, shape index: {}]
  %s3 = inlined_call_operand.hbm [shape: f32[2,48,128], index: 3, kind: output, shape index: {}]
  %s4 = sld [smem:[#allocation0]]
  $region49: #{tpu_custom_call.1} parent=0
    _
  %s6 = ssub.s32 1, %s4
  %s7 = scalar_select 0, %s6, %s4
  $region1: #{tpu_custom_call.1} parent=0
    #allocation2 [shape = 'u8[49152]{0}', space=vmem, size = 0xc000, scoped, tag = 'input window, operand 2']
    #allocation3 [shape = 's32[2]{0}', space=sflag, size = 0x8, scoped, tag = 'scoped memory for tpu_custom_call.1']
    #allocation4 [shape = 's32[2]{0}', space=sflag, size = 0x8, scoped, tag = 'scoped memory for tpu_custom_call.1']
    #allocation5 [shape = 'u8[49152]{0}', space=vmem, size = 0xc000, scoped, tag = 'output window, operand 0']
    %8 = vsyncpa [#allocation3], 0
    %s9 = scalar_lea.sflag [#allocation3], 1
    %10 = vsyncpa %s9, 0
    %11 = vsyncpa [#allocation4], 0
    %s12 = scalar_lea.sflag [#allocation4], 1
    %13 = vsyncpa %s12, 0
    loop: start=0, step=1, limit=4
    $region2: #{tpu_custom_call.1} parent=1 // loop_pre_header
      _
    $region3: #{tpu_custom_call.1} parent=1 // loop_header
      %s15 = sphi 0, %s19
      %p16 = scmp.ge.s32.totalorder %s15, 4
      %s23 = sphi 0, %s23
      %s25 = sphi 0, %s23
      %s26 = sphi 0, %s25
      %s40 = sphi 0, %s26
      %s46 = sphi 0, %s48
      %s49 = sphi 0, %s46
      %s50 = sphi 0, %s49
      %s66 = sphi 0, %s50
      %s72 = sphi 0, %s74
      %s75 = sphi 0, %s72
      %s76 = sphi 0, %s75
      %s92 = sphi 0, %s76
      %s98 = sphi 0, %s100
      %s101 = sphi 0, %s98
      %s102 = sphi 0, %s101
      %s118 = sphi 0, %s102
    $region4: #{tpu_custom_call.1} parent=1 // loop_header_branch
      %18 = sbr.rel (%p16) target = $region8
    $region5: #{tpu_custom_call.1} parent=1 // loop_body
      %s20 = ssub.s32 %s15, 1
      %s21 = ssub.s32 %s15, 2
      %s22 = sadd.s32 %s15, 1
      %s24 = sadd.s32 %s23, 1
      %p27 = scmp.eq.s32.totalorder %s15, 1
      %p28 = scmp.ne.s32.totalorder %s23, %s25
      %p29 = scmp.eq.s32.totalorder %s15, 0
      %p30 = por %p28, %p29
      %p31 = scmp.ne.s32.totalorder %s23, %s25
      %p32 = scmp.eq.s32.totalorder %s20, 1
      %p33 = por %p31, %p32
      %p34 = scmp.ne.s32.totalorder %s25, %s26
      %p35 = scmp.eq.s32.totalorder %s20, 0
      %p36 = por %p34, %p35
      %p37 = scmp.ne.s32.totalorder %s25, %s26
      %p38 = scmp.eq.s32.totalorder %s21, 1
      %p39 = por %p37, %p38
      %p41 = scmp.ne.s32.totalorder %s26, %s40
      %p42 = scmp.eq.s32.totalorder %s21, 0
      %p43 = por %p41, %p42
      %s44 = ssub.s32 %s15, %s22
      %p45 = scmp.eq.s32.totalorder %s44, 0
      %s47 = sadd.s32 %s46, 1
      %s48 = scalar_select %p45, %s46, %s47
      %p51 = pneg %p45
      %p52 = scmp.eq.s32.totalorder %s15, 1
      %p53 = por %p51, %p52
      %p54 = scmp.ne.s32.totalorder %s46, %s49
      %p55 = scmp.eq.s32.totalorder %s15, 0
      %p56 = por %p54, %p55
      %p57 = scmp.ne.s32.totalorder %s46, %s49
      %p58 = scmp.eq.s32.totalorder %s20, 1
      %p59 = por %p57, %p58
      %p60 = scmp.ne.s32.totalorder %s49, %s50
      %p61 = scmp.eq.s32.totalorder %s20, 0
      %p62 = por %p60, %p61
      %p63 = scmp.ne.s32.totalorder %s49, %s50
      %p64 = scmp.eq.s32.totalorder %s21, 1
      %p65 = por %p63, %p64
      %p67 = scmp.ne.s32.totalorder %s50, %s66
      %p68 = scmp.eq.s32.totalorder %s21, 0
      %p69 = por %p67, %p68
      %s70 = ssub.s32 %s15, %s22
      %p71 = scmp.eq.s32.totalorder %s70, 0
      %s73 = sadd.s32 %s72, 1
      %s74 = scalar_select %p71, %s72, %s73
      %p77 = pneg %p71
      %p78 = scmp.eq.s32.totalorder %s15, 1
      %p79 = por %p77, %p78
      %p80 = scmp.ne.s32.totalorder %s72, %s75
      %p81 = scmp.eq.s32.totalorder %s15, 0
      %p82 = por %p80, %p81
      %p83 = scmp.ne.s32.totalorder %s72, %s75
      %p84 = scmp.eq.s32.totalorder %s20, 1
      %p85 = por %p83, %p84
      %p86 = scmp.ne.s32.totalorder %s75, %s76
      %p87 = scmp.eq.s32.totalorder %s20, 0
      %p88 = por %p86, %p87
      %p89 = scmp.ne.s32.totalorder %s75, %s76
      %p90 = scmp.eq.s32.totalorder %s21, 1
      %p91 = por %p89, %p90
      %p93 = scmp.ne.s32.totalorder %s76, %s92
      %p94 = scmp.eq.s32.totalorder %s21, 0
      %p95 = por %p93, %p94
      %s96 = ssub.s32 %s15, %s22
      %p97 = scmp.eq.s32.totalorder %s96, 0
      %s99 = sadd.s32 %s98, 1
      %s100 = scalar_select %p97, %s98, %s99
      %p103 = pneg %p97
      %p104 = scmp.eq.s32.totalorder %s15, 1
      %p105 = por %p103, %p104
      %p106 = scmp.ne.s32.totalorder %s98, %s101
      %p107 = scmp.eq.s32.totalorder %s15, 0
      %p108 = por %p106, %p107
      %p109 = scmp.ne.s32.totalorder %s98, %s101
      %p110 = scmp.eq.s32.totalorder %s20, 1
      %p111 = por %p109, %p110
      %p112 = scmp.ne.s32.totalorder %s101, %s102
      %p113 = scmp.eq.s32.totalorder %s20, 0
      %p114 = por %p112, %p113
      %p115 = scmp.ne.s32.totalorder %s101, %s102
      %p116 = scmp.eq.s32.totalorder %s21, 1
      %p117 = por %p115, %p116
      %p119 = scmp.ne.s32.totalorder %s102, %s118
      %p120 = scmp.eq.s32.totalorder %s21, 0
      %p121 = por %p119, %p120
      %p122 = scmp.le.s32.totalorder 1, %s15
      %p123 = scmp.lt.s32.totalorder %s15, 3
      %p124 = pnand %p122, %p123
      %p125 = pneg %p124
      // Predicated region
      $region9: #{tpu_custom_call.1} parent=5 // pred_check
        _
      $region10: #{tpu_custom_call.1} parent=5 // pred_check_branch
        %127 = sbr.rel (%p124) target = $region12
      $region11: #{tpu_custom_call.1} parent=5 // pred_region
        %s128 = ssub.s32 %s15, 1
        // Predicated region
        $region13: #{tpu_custom_call.1} parent=11 // pred_check
          %p129 = pneg %p36
        $region14: #{tpu_custom_call.1} parent=11 // pred_check_branch
          %131 = sbr.rel (%p129) target = $region16
        $region15: #{tpu_custom_call.1} parent=11 // pred_region
          _
        $region16: #{tpu_custom_call.1} parent=11 // pred_fallthru
          _
      $region12: #{tpu_custom_call.1} parent=5 // pred_fallthru
        _
      %p132 = scmp.lt.s32.totalorder %s15, 2
      // Predicated region
      $region17: #{tpu_custom_call.1} parent=5 // pred_check
        %p133 = pneg %p132
      $region18: #{tpu_custom_call.1} parent=5 // pred_check_branch
        %135 = sbr.rel (%p133) target = $region20
      $region19: #{tpu_custom_call.1} parent=5 // pred_region
        // Predicated region
        $region21: #{tpu_custom_call.1} parent=19 // pred_check
          %p136 = pneg %p56
        $region22: #{tpu_custom_call.1} parent=19 // pred_check_branch
          %138 = sbr.rel (%p136) target = $region24
        $region23: #{tpu_custom_call.1} parent=19 // pred_region
          %p139 = scmp.lt.s32.totalorder %s15, 1
          %s140 = scalar_select %p139, %s15, 1
          %s141 = smul.addr %s140, 8
          %s142 = scalar_lea.vmem %s1, %s141
        $region24: #{tpu_custom_call.1} parent=19 // pred_fallthru
          _
        // Predicated region
        $region25: #{tpu_custom_call.1} parent=19 // pred_check
          %p143 = pneg %p82
        $region26: #{tpu_custom_call.1} parent=19 // pred_check_branch
          %145 = sbr.rel (%p143) target = $region28
        $region27: #{tpu_custom_call.1} parent=19 // pred_region
          %s146 = sand.u32 %s72, 1
          %s147 = scalar_lea.sflag [#allocation3], %s146
          %s148 = sand.u32 %s72, 1
          %s149 = smul.addr %s148, 48
          %s150 = scalar_lea.vmem [#allocation2], %s149
          %152 = vsyncadd %s147, 0
          %s153 = smul.addr %s15, 6
          %s154 = smul.addr %s153, 8
          %s155 = scalar_lea.hbm %s2, %s154
          %s156 = sshll.u32 %s155, 4
          %s157 = int_to_ptr.hbm [resolvable:$true] %s156
          %s158 = sshll.u32 %s150, 4
          %s159 = int_to_ptr.vmem [resolvable:$true] %s158
          %164 = dma.hbm_to_vmem [thread:$0]  %s157, 768, %s159, %s147, 128, 128, 8
        $region28: #{tpu_custom_call.1} parent=19 // pred_fallthru
          _
      $region20: #{tpu_custom_call.1} parent=5 // pred_fallthru
        _
      %p165 = scmp.le.s32.totalorder 1, %s15
      %p166 = scmp.lt.s32.totalorder %s15, 3
      %p167 = pnand %p165, %p166
      %p168 = pneg %p167
      // Predicated region
      $region29: #{tpu_custom_call.1} parent=5 // pred_check
        _
      $region30: #{tpu_custom_call.1} parent=5 // pred_check_branch
        %170 = sbr.rel (%p167) target = $region32
      $region31: #{tpu_custom_call.1} parent=5 // pred_region
        %s171 = ssub.s32 %s15, 1
        %s172 = sand.u32 %s75, 1
        %s173 = scalar_lea.sflag [#allocation3], %s172
        %s174 = sand.u32 %s75, 1
        %s175 = smul.addr %s174, 48
        %s176 = scalar_lea.vmem [#allocation2], %s175
        // Predicated region
        $region33: #{tpu_custom_call.1} parent=31 // pred_check
          %p177 = pneg %p88
        $region34: #{tpu_custom_call.1} parent=31 // pred_check_branch
          %179 = sbr.rel (%p177) target = $region36
        $region35: #{tpu_custom_call.1} parent=31 // pred_region
          %181 = dma.done %s173, 768
        $region36: #{tpu_custom_call.1} parent=31 // pred_fallthru
          _
        %p182 = pneg %p36
        %p183 = pneg %p33
        %p184 = scmp.lt.s32.totalorder %s20, 1
        %s185 = scalar_select %p184, %s20, 1
        %s186 = smul.addr %s185, 8
        %s187 = scalar_lea.vmem %s1, %s186
        %p188 = pneg %p62
        %p189 = pneg %p59
        %s190 = sand.u32 %s75, 1
        %s191 = scalar_lea.sflag [#allocation3], %s190
        %s192 = sand.u32 %s75, 1
        %s193 = smul.addr %s192, 48
        %s194 = scalar_lea.vmem [#allocation2], %s193
        %p195 = pneg %p88
        %p196 = pneg %p85
        %p197 = pneg %p114
        %p198 = pneg %p111
        %s199 = sand.u32 %s101, 1
        %s200 = scalar_lea.sflag [#allocation4], %s199
        %s201 = sand.u32 %s101, 1
        %s202 = smul.addr %s201, 48
        %s203 = scalar_lea.vmem [#allocation5], %s202
        %p204 = scmp.lt.s32.totalorder %s20, 1
        %s205 = scalar_select %p204, %s20, 1
        %s206 = smul.addr %s205, 8
        %s207 = scalar_lea.vmem %s1, %s206
        %v208 = vld [vmem:[%s0] sm:$0xff]
        %v209 = vld [vmem:[%s0 + $0x8] sm:$0xff]
        %v210 = vld [vmem:[%s0 + $0x10] sm:$0xff]
        %v211 = vld [vmem:[%s0 + $0x18] sm:$0xff]
        %v212 = vld [vmem:[%s0 + $0x20] sm:$0xff]
        %v213 = vld [vmem:[%s0 + $0x28] sm:$0xff]
        %v214 = vld [vmem:[%s207] sm:$0xff]
        %vm215 = vcmask 64512
        %v217 = vsel %vm215, %v208, 0
        %v220 = vsel %vm215, %v209, 0
        %v223 = vsel %vm215, %v210, 0
        %v226 = vsel %vm215, %v211, 0
        %v229 = vsel %vm215, %v212, 0
        %v232 = vsel %vm215, %v213, 0
        %234 = vmatpush.msra.mxu0 0.0
        %235 = vmatpush.msra.mxu0 0.0
        %236 = vmatpush.msra.mxu0 0.0
        %237 = vmatpush.msra.mxu0 0.0
        %238 = vmatpush.msra.mxu0 0.0
        %239 = vmatpush.msra.mxu0 0.0
        %240 = vmatpush.msra.mxu0 0.0
        %241 = vmatpush.msra.mxu0 0.0
        %242 = vmatpush.msra.mxu0 0.0
        %243 = vmatpush.msra.mxu0 0.0
        %244 = vmatpush.msra.mxu0 0.0
        %245 = vmatpush.msra.mxu0 0.0
        %246 = vmatpush.msra.mxu0 0.0
        %247 = vmatpush.msra.mxu0 0.0
        %248 = vmatpush.msra.mxu0 0.0
        %249 = vmatpush.msra.mxu0 %v214
        %250 = vmatmul.f32.gmra.mxu0 %v217
        %v251 = vpop.f32.mrf.mxu0
        %v252 = vadd.f32 0.0, %v251
        %253 = vmatmul.f32.gmra.mxu0 %v220
        %v254 = vpop.f32.mrf.mxu0
        %v255 = vadd.f32 0.0, %v254
        %256 = vmatmul.f32.gmra.mxu0 %v223
        %v257 = vpop.f32.mrf.mxu0
        %v258 = vadd.f32 0.0, %v257
        %259 = vmatmul.f32.gmra.mxu0 %v226
        %v260 = vpop.f32.mrf.mxu0
        %v261 = vadd.f32 0.0, %v260
        %262 = vmatmul.f32.gmra.mxu0 %v229
        %v263 = vpop.f32.mrf.mxu0
        %v264 = vadd.f32 0.0, %v263
        %265 = vmatmul.f32.gmra.mxu0 %v232
        %v266 = vpop.f32.mrf.mxu0
        %v267 = vadd.f32 0.0, %v266
        %268 = vdwg.mxu0
        %v269 = vld [vmem:[%s176] sm:$0xff]
        %v270 = vld [vmem:[%s176 + $0x8] sm:$0xff]
        %v271 = vld [vmem:[%s176 + $0x10] sm:$0xff]
        %v272 = vld [vmem:[%s176 + $0x18] sm:$0xff]
        %v273 = vld [vmem:[%s176 + $0x20] sm:$0xff]
        %v274 = vld [vmem:[%s176 + $0x28] sm:$0xff]
        %v275 = vand.u32 2147483647, %v252
        %vm276 = vcmp.le.f32.partialorder %v275, 0.7853982
        %vm277 = vcmp.lt.s32.totalorder %v252, 0
        %v278 = vand.u32 %v252, 2139095040
        %v279 = vshrl.u32 %v278, 23
        %v280 = vsub.s32 %v279, 127
        %v281 = vand.u32 2147483647, %v252
        %v282 = vand.u32 %v281, 8388607
        %v283 = vor.u32 %v282, 8388608
        %v284 = vsub.s32 0, %v283
        %v285 = vadd.s32 %v280, 1
        %vm286 = vcmp.gt.s32.totalorder %v285, 0
        %v287 = vsel %vm286, %v285, 0
        %v288 = vshrl.u32 %v287, 5
        %v289 = vand.u32 %v287, 31
        %v290 = vsub.s32 32, %v289
        %v291 = vshrl.u32 683565275, %v290
        %v292 = vshll.u32 683565275, %v289
        %v293 = vshrl.u32 2475754826, %v290
        %v294 = vor.u32 %v292, %v293
        %v295 = vshll.u32 2475754826, %v289
        %v296 = vshrl.u32 2131351028, %v290
        %v297 = vor.u32 %v295, %v296
        %v298 = vshll.u32 2131351028, %v289
        %v299 = vshrl.u32 2102212464, %v290
        %v300 = vor.u32 %v298, %v299
        %v301 = vshll.u32 2102212464, %v289
        %v302 = vshrl.u32 920167782, %v290
        %v303 = vor.u32 %v301, %v302
        %v304 = vshll.u32 920167782, %v289
        %v305 = vshrl.u32 1326507024, %v290
        %v306 = vor.u32 %v304, %v305
        %vm307 = vcmp.lt.s32.totalorder %v288, 1
        %vm308 = vcmp.lt.s32.totalorder %v288, 2
        %vm309 = vcmp.lt.s32.totalorder %v288, 3
        %vm310 = vcmp.lt.s32.totalorder %v288, 4
        %v311 = vsel %vm307, %v291, %v294
        %v312 = vsel %vm310, %v300, 2102212464
        %v313 = vsel %vm309, %v297, %v312
        %v314 = vsel %vm308, %v311, %v313
        %v315 = vsel %vm307, %v294, %v297
        %v316 = vsel %vm310, %v303, 920167782
        %v317 = vsel %vm309, %v300, %v316
        %v318 = vsel %vm308, %v315, %v317
        %v319 = vsel %vm307, %v297, %v300
        %v320 = vsel %vm310, %v306, 1326507024
        %v321 = vsel %vm309, %v303, %v320
        %v322 = vsel %vm308, %v319, %v321
        %v323 = vshll.u32 %v283, 8
        %v324 = vand.u32 %v323, 65535
        %v325 = vshrl.u32 %v323, 16
        %v326 = vand.u32 %v322, 65535
        %v327 = vshrl.u32 %v322, 16
        %v328 = vmul.u32 %v324, %v326
        %v329 = vmul.u32 %v324, %v327
        %v330 = vmul.u32 %v325, %v326
        %v331 = vmul.u32 %v325, %v327
        %v332 = vshll.u32 %v329, 16
        %v333 = vshrl.u32 %v329, 16
        %v334 = vshll.u32 %v330, 16
        %v335 = vshrl.u32 %v330, 16
        %vm336 = vc.u32 %v328, %v332
        %v337 = vsel %vm336, 1, 0
        %v338 = vadd.s32 %v328, %v332
        %v339 = vadd.s32 %v331, %v337
        %vm340 = vc.u32 %v338, %v334
        %v341 = vsel %vm340, 1, 0
        %v342 = vadd.s32 %v338, %v334
        %v343 = vadd.s32 %v339, %v341
        %v344 = vadd.s32 %v343, %v333
        %v345 = vadd.s32 %v344, %v335
        %v346 = vand.u32 %v323, 65535
        %v347 = vshrl.u32 %v323, 16
        %v348 = vand.u32 %v318, 65535
        %v349 = vshrl.u32 %v318, 16
        %v350 = vmul.u32 %v346, %v348
        %v351 = vmul.u32 %v346, %v349
        %v352 = vmul.u32 %v347, %v348
        %v353 = vmul.u32 %v347, %v349
        %v354 = vshll.u32 %v351, 16
        %v355 = vshrl.u32 %v351, 16
        %v356 = vshll.u32 %v352, 16
        %v357 = vshrl.u32 %v352, 16
        %vm358 = vc.u32 %v350, %v354
        %v359 = vsel %vm358, 1, 0
        %v360 = vadd.s32 %v350, %v354
        %v361 = vadd.s32 %v353, %v359
        %vm362 = vc.u32 %v360, %v356
        %v363 = vsel %vm362, 1, 0
        %v364 = vadd.s32 %v360, %v356
        %v365 = vadd.s32 %v361, %v363
        %v366 = vadd.s32 %v365, %v355
        %v367 = vadd.s32 %v366, %v357
        %v368 = vmul.u32 %v323, %v314
        %v369 = vadd.s32 %v345, %v364
        %vm370 = vc.u32 %v345, %v364
        %v371 = vadd.s32 %v367, 1
        %v372 = vsel %vm370, %v371, %v367
        %v373 = vadd.s32 %v368, %v372
        %v374 = vadd.s32 %v373, 536870912
        %v375 = vshrl.u32 %v374, 30
        %v376 = vshll.u32 %v375, 30
        %v377 = vsub.s32 %v373, %v376
        %vm378 = vcmp.lt.s32.totalorder %v377, 0
        %v379 = vsub.s32 0, %v377
        %v380 = vsel %vm378, %v379, %v377
        %v381 = vclz %v380
        %v382 = vsub.s32 %v381, 2
        %vm383 = vcmp.gt.s32.totalorder 0, %v382
        %v384 = vsel %vm383, 0, %v382
        %v385 = vsub.s32 32, %v384
        %v386 = vshll.u32 %v377, %v384
        %v387 = vshrl.u32 %v369, %v385
        %v388 = vor.u32 %v386, %v387
        %v389 = vsub.s32 4294967266, %v384
        %v390 = vadd.s32 %v389, 127
        %v391 = vshll.u32 %v390, 23
        %v392 = vor.u32 4788187, %v391
        %v393 = vand.u32 2147483647, %v392
        %v395 = vcvt.s32.f32 %v388
        %v396 = vmul.f32 %v395, %v393
        %v397 = vxor.u32 %v396, 2147483648
        %v398 = vsel %vm277, %v397, %v396
        %v399 = vsub.s32 4, %v375
        %v400 = vsel %vm277, %v399, %v375
        %v401 = vsel %vm276, %v252, %v398
        %v402 = vsel %vm276, 0, %v400
        %v403 = vmul.f32 %v401, %v401
        %v404 = vmul.f32 %v403, -0.001358992
        %v405 = vadd.f32 %v404, 0.041655596
        %v406 = vmul.f32 %v403, %v405
        %v407 = vadd.f32 %v406, -0.4999988
        %v408 = vmul.f32 %v403, %v407
        %v409 = vadd.f32 1.0, %v408
        %v410 = vmul.f32 %v401, %v401
        %v411 = vmul.f32 %v410, -0.00019511016
        %v412 = vadd.f32 %v411, 0.008332121
        %v413 = vmul.f32 %v410, %v412
        %v414 = vadd.f32 %v413, -0.16666654
        %v415 = vmul.f32 %v410, %v414
        %v416 = vadd.f32 %v415, 1.0
        %v417 = vmul.f32 %v416, %v401
        %vm418 = vweird.f32 %v252
        %v419 = vadd.s32 %v402, 3
        %v420 = vand.u32 %v419, 3
        %vm421 = vcmp.lt.s32.totalorder %v420, 2
        %vm422 = vcmp.eq.s32.totalorder %v420, 0
        %v423 = vxor.u32 %v417, 2147483648
        %v424 = vsel %vm422, %v409, %v423
        %vm425 = vcmp.eq.s32.totalorder %v420, 2
        %v426 = vxor.u32 %v409, 2147483648
        %v427 = vsel %vm425, %v426, %v417
        %v428 = vsel %vm421, %v424, %v427
        %v429 = vsel %vm418, nan, %v428
        %v430 = vand.u32 2147483647, %v255
        %vm431 = vcmp.le.f32.partialorder %v430, 0.7853982
        %vm432 = vcmp.lt.s32.totalorder %v255, 0
        %v433 = vand.u32 %v255, 2139095040
        %v434 = vshrl.u32 %v433, 23
        %v435 = vsub.s32 %v434, 127
        %v436 = vand.u32 2147483647, %v255
        %v437 = vand.u32 %v436, 8388607
        %v438 = vor.u32 %v437, 8388608
        %v439 = vsub.s32 0, %v438
        %v440 = vadd.s32 %v435, 1
        %vm441 = vcmp.gt.s32.totalorder %v440, 0
        %v442 = vsel %vm441, %v440, 0
        %v443 = vshrl.u32 %v442, 5
        %v444 = vand.u32 %v442, 31
        %v445 = vsub.s32 32, %v444
        %v446 = vshrl.u32 683565275, %v445
        %v447 = vshll.u32 683565275, %v444
        %v448 = vshrl.u32 2475754826, %v445
        %v449 = vor.u32 %v447, %v448
        %v450 = vshll.u32 2475754826, %v444
        %v451 = vshrl.u32 2131351028, %v445
        %v452 = vor.u32 %v450, %v451
        %v453 = vshll.u32 2131351028, %v444
        %v454 = vshrl.u32 2102212464, %v445
        %v455 = vor.u32 %v453, %v454
        %v456 = vshll.u32 2102212464, %v444
        %v457 = vshrl.u32 920167782, %v445
        %v458 = vor.u32 %v456, %v457
        %v459 = vshll.u32 920167782, %v444
        %v460 = vshrl.u32 1326507024, %v445
        %v461 = vor.u32 %v459, %v460
        %vm462 = vcmp.lt.s32.totalorder %v443, 1
        %vm463 = vcmp.lt.s32.totalorder %v443, 2
        %vm464 = vcmp.lt.s32.totalorder %v443, 3
        %vm465 = vcmp.lt.s32.totalorder %v443, 4
        %v466 = vsel %vm462, %v446, %v449
        %v467 = vsel %vm465, %v455, 2102212464
        %v468 = vsel %vm464, %v452, %v467
        %v469 = vsel %vm463, %v466, %v468
        %v470 = vsel %vm462, %v449, %v452
        %v471 = vsel %vm465, %v458, 920167782
        %v472 = vsel %vm464, %v455, %v471
        %v473 = vsel %vm463, %v470, %v472
        %v474 = vsel %vm462, %v452, %v455
        %v475 = vsel %vm465, %v461, 1326507024
        %v476 = vsel %vm464, %v458, %v475
        %v477 = vsel %vm463, %v474, %v476
        %v478 = vshll.u32 %v438, 8
        %v479 = vand.u32 %v478, 65535
        %v480 = vshrl.u32 %v478, 16
        %v481 = vand.u32 %v477, 65535
        %v482 = vshrl.u32 %v477, 16
        %v483 = vmul.u32 %v479, %v481
        %v484 = vmul.u32 %v479, %v482
        %v485 = vmul.u32 %v480, %v481
        %v486 = vmul.u32 %v480, %v482
        %v487 = vshll.u32 %v484, 16
        %v488 = vshrl.u32 %v484, 16
        %v489 = vshll.u32 %v485, 16
        %v490 = vshrl.u32 %v485, 16
        %vm491 = vc.u32 %v483, %v487
        %v492 = vsel %vm491, 1, 0
        %v493 = vadd.s32 %v483, %v487
        %v494 = vadd.s32 %v486, %v492
        %vm495 = vc.u32 %v493, %v489
        %v496 = vsel %vm495, 1, 0
        %v497 = vadd.s32 %v493, %v489
        %v498 = vadd.s32 %v494, %v496
        %v499 = vadd.s32 %v498, %v488
        %v500 = vadd.s32 %v499, %v490
        %v501 = vand.u32 %v478, 65535
        %v502 = vshrl.u32 %v478, 16
        %v503 = vand.u32 %v473, 65535
        %v504 = vshrl.u32 %v473, 16
        %v505 = vmul.u32 %v501, %v503
        %v506 = vmul.u32 %v501, %v504
        %v507 = vmul.u32 %v502, %v503
        %v508 = vmul.u32 %v502, %v504
        %v509 = vshll.u32 %v506, 16
        %v510 = vshrl.u32 %v506, 16
        %v511 = vshll.u32 %v507, 16
        %v512 = vshrl.u32 %v507, 16
        %vm513 = vc.u32 %v505, %v509
        %v514 = vsel %vm513, 1, 0
        %v515 = vadd.s32 %v505, %v509
        %v516 = vadd.s32 %v508, %v514
        %vm517 = vc.u32 %v515, %v511
        %v518 = vsel %vm517, 1, 0
        %v519 = vadd.s32 %v515, %v511
        %v520 = vadd.s32 %v516, %v518
        %v521 = vadd.s32 %v520, %v510
        %v522 = vadd.s32 %v521, %v512
        %v523 = vmul.u32 %v478, %v469
        %v524 = vadd.s32 %v500, %v519
        %vm525 = vc.u32 %v500, %v519
        %v526 = vadd.s32 %v522, 1
        %v527 = vsel %vm525, %v526, %v522
        %v528 = vadd.s32 %v523, %v527
        %v529 = vadd.s32 %v528, 536870912
        %v530 = vshrl.u32 %v529, 30
        %v531 = vshll.u32 %v530, 30
        %v532 = vsub.s32 %v528, %v531
        %vm533 = vcmp.lt.s32.totalorder %v532, 0
        %v534 = vsub.s32 0, %v532
        %v535 = vsel %vm533, %v534, %v532
        %v536 = vclz %v535
        %v537 = vsub.s32 %v536, 2
        %vm538 = vcmp.gt.s32.totalorder 0, %v537
        %v539 = vsel %vm538, 0, %v537
        %v540 = vsub.s32 32, %v539
        %v541 = vshll.u32 %v532, %v539
        %v542 = vshrl.u32 %v524, %v540
        %v543 = vor.u32 %v541, %v542
        %v544 = vsub.s32 4294967266, %v539
        %v545 = vadd.s32 %v544, 127
        %v546 = vshll.u32 %v545, 23
        %v547 = vor.u32 4788187, %v546
        %v548 = vand.u32 2147483647, %v547
        %v550 = vcvt.s32.f32 %v543
        %v551 = vmul.f32 %v550, %v548
        %v552 = vxor.u32 %v551, 2147483648
        %v553 = vsel %vm432, %v552, %v551
        %v554 = vsub.s32 4, %v530
        %v555 = vsel %vm432, %v554, %v530
        %v556 = vsel %vm431, %v255, %v553
        %v557 = vsel %vm431, 0, %v555
        %v558 = vmul.f32 %v556, %v556
        %v559 = vmul.f32 %v558, -0.001358992
        %v560 = vadd.f32 %v559, 0.041655596
        %v561 = vmul.f32 %v558, %v560
        %v562 = vadd.f32 %v561, -0.4999988
        %v563 = vmul.f32 %v558, %v562
        %v564 = vadd.f32 1.0, %v563
        %v565 = vmul.f32 %v556, %v556
        %v566 = vmul.f32 %v565, -0.00019511016
        %v567 = vadd.f32 %v566, 0.008332121
        %v568 = vmul.f32 %v565, %v567
        %v569 = vadd.f32 %v568, -0.16666654
        %v570 = vmul.f32 %v565, %v569
        %v571 = vadd.f32 %v570, 1.0
        %v572 = vmul.f32 %v571, %v556
        %vm573 = vweird.f32 %v255
        %v574 = vadd.s32 %v557, 3
        %v575 = vand.u32 %v574, 3
        %vm576 = vcmp.lt.s32.totalorder %v575, 2
        %vm577 = vcmp.eq.s32.totalorder %v575, 0
        %v578 = vxor.u32 %v572, 2147483648
        %v579 = vsel %vm577, %v564, %v578
        %vm580 = vcmp.eq.s32.totalorder %v575, 2
        %v581 = vxor.u32 %v564, 2147483648
        %v582 = vsel %vm580, %v581, %v572
        %v583 = vsel %vm576, %v579, %v582
        %v584 = vsel %vm573, nan, %v583
        %v585 = vand.u32 2147483647, %v258
        %vm586 = vcmp.le.f32.partialorder %v585, 0.7853982
        %vm587 = vcmp.lt.s32.totalorder %v258, 0
        %v588 = vand.u32 %v258, 2139095040
        %v589 = vshrl.u32 %v588, 23
        %v590 = vsub.s32 %v589, 127
        %v591 = vand.u32 2147483647, %v258
        %v592 = vand.u32 %v591, 8388607
        %v593 = vor.u32 %v592, 8388608
        %v594 = vsub.s32 0, %v593
        %v595 = vadd.s32 %v590, 1
        %vm596 = vcmp.gt.s32.totalorder %v595, 0
        %v597 = vsel %vm596, %v595, 0
        %v598 = vshrl.u32 %v597, 5
        %v599 = vand.u32 %v597, 31
        %v600 = vsub.s32 32, %v599
        %v601 = vshrl.u32 683565275, %v600
        %v602 = vshll.u32 683565275, %v599
        %v603 = vshrl.u32 2475754826, %v600
        %v604 = vor.u32 %v602, %v603
        %v605 = vshll.u32 2475754826, %v599
        %v606 = vshrl.u32 2131351028, %v600
        %v607 = vor.u32 %v605, %v606
        %v608 = vshll.u32 2131351028, %v599
        %v609 = vshrl.u32 2102212464, %v600
        %v610 = vor.u32 %v608, %v609
        %v611 = vshll.u32 2102212464, %v599
        %v612 = vshrl.u32 920167782, %v600
        %v613 = vor.u32 %v611, %v612
        %v614 = vshll.u32 920167782, %v599
        %v615 = vshrl.u32 1326507024, %v600
        %v616 = vor.u32 %v614, %v615
        %vm617 = vcmp.lt.s32.totalorder %v598, 1
        %vm618 = vcmp.lt.s32.totalorder %v598, 2
        %vm619 = vcmp.lt.s32.totalorder %v598, 3
        %vm620 = vcmp.lt.s32.totalorder %v598, 4
        %v621 = vsel %vm617, %v601, %v604
        %v622 = vsel %vm620, %v610, 2102212464
        %v623 = vsel %vm619, %v607, %v622
        %v624 = vsel %vm618, %v621, %v623
        %v625 = vsel %vm617, %v604, %v607
        %v626 = vsel %vm620, %v613, 920167782
        %v627 = vsel %vm619, %v610, %v626
        %v628 = vsel %vm618, %v625, %v627
        %v629 = vsel %vm617, %v607, %v610
        %v630 = vsel %vm620, %v616, 1326507024
        %v631 = vsel %vm619, %v613, %v630
        %v632 = vsel %vm618, %v629, %v631
        %v633 = vshll.u32 %v593, 8
        %v634 = vand.u32 %v633, 65535
        %v635 = vshrl.u32 %v633, 16
        %v636 = vand.u32 %v632, 65535
        %v637 = vshrl.u32 %v632, 16
        %v638 = vmul.u32 %v634, %v636
        %v639 = vmul.u32 %v634, %v637
        %v640 = vmul.u32 %v635, %v636
        %v641 = vmul.u32 %v635, %v637
        %v642 = vshll.u32 %v639, 16
        %v643 = vshrl.u32 %v639, 16
        %v644 = vshll.u32 %v640, 16
        %v645 = vshrl.u32 %v640, 16
        %vm646 = vc.u32 %v638, %v642
        %v647 = vsel %vm646, 1, 0
        %v648 = vadd.s32 %v638, %v642
        %v649 = vadd.s32 %v641, %v647
        %vm650 = vc.u32 %v648, %v644
        %v651 = vsel %vm650, 1, 0
        %v652 = vadd.s32 %v648, %v644
        %v653 = vadd.s32 %v649, %v651
        %v654 = vadd.s32 %v653, %v643
        %v655 = vadd.s32 %v654, %v645
        %v656 = vand.u32 %v633, 65535
        %v657 = vshrl.u32 %v633, 16
        %v658 = vand.u32 %v628, 65535
        %v659 = vshrl.u32 %v628, 16
        %v660 = vmul.u32 %v656, %v658
        %v661 = vmul.u32 %v656, %v659
        %v662 = vmul.u32 %v657, %v658
        %v663 = vmul.u32 %v657, %v659
        %v664 = vshll.u32 %v661, 16
        %v665 = vshrl.u32 %v661, 16
        %v666 = vshll.u32 %v662, 16
        %v667 = vshrl.u32 %v662, 16
        %vm668 = vc.u32 %v660, %v664
        %v669 = vsel %vm668, 1, 0
        %v670 = vadd.s32 %v660, %v664
        %v671 = vadd.s32 %v663, %v669
        %vm672 = vc.u32 %v670, %v666
        %v673 = vsel %vm672, 1, 0
        %v674 = vadd.s32 %v670, %v666
        %v675 = vadd.s32 %v671, %v673
        %v676 = vadd.s32 %v675, %v665
        %v677 = vadd.s32 %v676, %v667
        %v678 = vmul.u32 %v633, %v624
        %v679 = vadd.s32 %v655, %v674
        %vm680 = vc.u32 %v655, %v674
        %v681 = vadd.s32 %v677, 1
        %v682 = vsel %vm680, %v681, %v677
        %v683 = vadd.s32 %v678, %v682
        %v684 = vadd.s32 %v683, 536870912
        %v685 = vshrl.u32 %v684, 30
        %v686 = vshll.u32 %v685, 30
        %v687 = vsub.s32 %v683, %v686
        %vm688 = vcmp.lt.s32.totalorder %v687, 0
        %v689 = vsub.s32 0, %v687
        %v690 = vsel %vm688, %v689, %v687
        %v691 = vclz %v690
        %v692 = vsub.s32 %v691, 2
        %vm693 = vcmp.gt.s32.totalorder 0, %v692
        %v694 = vsel %vm693, 0, %v692
        %v695 = vsub.s32 32, %v694
        %v696 = vshll.u32 %v687, %v694
        %v697 = vshrl.u32 %v679, %v695
        %v698 = vor.u32 %v696, %v697
        %v699 = vsub.s32 4294967266, %v694
        %v700 = vadd.s32 %v699, 127
        %v701 = vshll.u32 %v700, 23
        %v702 = vor.u32 4788187, %v701
        %v703 = vand.u32 2147483647, %v702
        %v705 = vcvt.s32.f32 %v698
        %v706 = vmul.f32 %v705, %v703
        %v707 = vxor.u32 %v706, 2147483648
        %v708 = vsel %vm587, %v707, %v706
        %v709 = vsub.s32 4, %v685
        %v710 = vsel %vm587, %v709, %v685
        %v711 = vsel %vm586, %v258, %v708
        %v712 = vsel %vm586, 0, %v710
        %v713 = vmul.f32 %v711, %v711
        %v714 = vmul.f32 %v713, -0.001358992
        %v715 = vadd.f32 %v714, 0.041655596
        %v716 = vmul.f32 %v713, %v715
        %v717 = vadd.f32 %v716, -0.4999988
        %v718 = vmul.f32 %v713, %v717
        %v719 = vadd.f32 1.0, %v718
        %v720 = vmul.f32 %v711, %v711
        %v721 = vmul.f32 %v720, -0.00019511016
        %v722 = vadd.f32 %v721, 0.008332121
        %v723 = vmul.f32 %v720, %v722
        %v724 = vadd.f32 %v723, -0.16666654
        %v725 = vmul.f32 %v720, %v724
        %v726 = vadd.f32 %v725, 1.0
        %v727 = vmul.f32 %v726, %v711
        %vm728 = vweird.f32 %v258
        %v729 = vadd.s32 %v712, 3
        %v730 = vand.u32 %v729, 3
        %vm731 = vcmp.lt.s32.totalorder %v730, 2
        %vm732 = vcmp.eq.s32.totalorder %v730, 0
        %v733 = vxor.u32 %v727, 2147483648
        %v734 = vsel %vm732, %v719, %v733
        %vm735 = vcmp.eq.s32.totalorder %v730, 2
        %v736 = vxor.u32 %v719, 2147483648
        %v737 = vsel %vm735, %v736, %v727
        %v738 = vsel %vm731, %v734, %v737
        %v739 = vsel %vm728, nan, %v738
        %v740 = vand.u32 2147483647, %v261
        %vm741 = vcmp.le.f32.partialorder %v740, 0.7853982
        %vm742 = vcmp.lt.s32.totalorder %v261, 0
        %v743 = vand.u32 %v261, 2139095040
        %v744 = vshrl.u32 %v743, 23
        %v745 = vsub.s32 %v744, 127
        %v746 = vand.u32 2147483647, %v261
        %v747 = vand.u32 %v746, 8388607
        %v748 = vor.u32 %v747, 8388608
        %v749 = vsub.s32 0, %v748
        %v750 = vadd.s32 %v745, 1
        %vm751 = vcmp.gt.s32.totalorder %v750, 0
        %v752 = vsel %vm751, %v750, 0
        %v753 = vshrl.u32 %v752, 5
        %v754 = vand.u32 %v752, 31
        %v755 = vsub.s32 32, %v754
        %v756 = vshrl.u32 683565275, %v755
        %v757 = vshll.u32 683565275, %v754
        %v758 = vshrl.u32 2475754826, %v755
        %v759 = vor.u32 %v757, %v758
        %v760 = vshll.u32 2475754826, %v754
        %v761 = vshrl.u32 2131351028, %v755
        %v762 = vor.u32 %v760, %v761
        %v763 = vshll.u32 2131351028, %v754
        %v764 = vshrl.u32 2102212464, %v755
        %v765 = vor.u32 %v763, %v764
        %v766 = vshll.u32 2102212464, %v754
        %v767 = vshrl.u32 920167782, %v755
        %v768 = vor.u32 %v766, %v767
        %v769 = vshll.u32 920167782, %v754
        %v770 = vshrl.u32 1326507024, %v755
        %v771 = vor.u32 %v769, %v770
        %vm772 = vcmp.lt.s32.totalorder %v753, 1
        %vm773 = vcmp.lt.s32.totalorder %v753, 2
        %vm774 = vcmp.lt.s32.totalorder %v753, 3
        %vm775 = vcmp.lt.s32.totalorder %v753, 4
        %v776 = vsel %vm772, %v756, %v759
        %v777 = vsel %vm775, %v765, 2102212464
        %v778 = vsel %vm774, %v762, %v777
        %v779 = vsel %vm773, %v776, %v778
        %v780 = vsel %vm772, %v759, %v762
        %v781 = vsel %vm775, %v768, 920167782
        %v782 = vsel %vm774, %v765, %v781
        %v783 = vsel %vm773, %v780, %v782
        %v784 = vsel %vm772, %v762, %v765
        %v785 = vsel %vm775, %v771, 1326507024
        %v786 = vsel %vm774, %v768, %v785
        %v787 = vsel %vm773, %v784, %v786
        %v788 = vshll.u32 %v748, 8
        %v789 = vand.u32 %v788, 65535
        %v790 = vshrl.u32 %v788, 16
        %v791 = vand.u32 %v787, 65535
        %v792 = vshrl.u32 %v787, 16
        %v793 = vmul.u32 %v789, %v791
        %v794 = vmul.u32 %v789, %v792
        %v795 = vmul.u32 %v790, %v791
        %v796 = vmul.u32 %v790, %v792
        %v797 = vshll.u32 %v794, 16
        %v798 = vshrl.u32 %v794, 16
        %v799 = vshll.u32 %v795, 16
        %v800 = vshrl.u32 %v795, 16
        %vm801 = vc.u32 %v793, %v797
        %v802 = vsel %vm801, 1, 0
        %v803 = vadd.s32 %v793, %v797
        %v804 = vadd.s32 %v796, %v802
        %vm805 = vc.u32 %v803, %v799
        %v806 = vsel %vm805, 1, 0
        %v807 = vadd.s32 %v803, %v799
        %v808 = vadd.s32 %v804, %v806
        %v809 = vadd.s32 %v808, %v798
        %v810 = vadd.s32 %v809, %v800
        %v811 = vand.u32 %v788, 65535
        %v812 = vshrl.u32 %v788, 16
        %v813 = vand.u32 %v783, 65535
        %v814 = vshrl.u32 %v783, 16
        %v815 = vmul.u32 %v811, %v813
        %v816 = vmul.u32 %v811, %v814
        %v817 = vmul.u32 %v812, %v813
        %v818 = vmul.u32 %v812, %v814
        %v819 = vshll.u32 %v816, 16
        %v820 = vshrl.u32 %v816, 16
        %v821 = vshll.u32 %v817, 16
        %v822 = vshrl.u32 %v817, 16
        %vm823 = vc.u32 %v815, %v819
        %v824 = vsel %vm823, 1, 0
        %v825 = vadd.s32 %v815, %v819
        %v826 = vadd.s32 %v818, %v824
        %vm827 = vc.u32 %v825, %v821
        %v828 = vsel %vm827, 1, 0
        %v829 = vadd.s32 %v825, %v821
        %v830 = vadd.s32 %v826, %v828
        %v831 = vadd.s32 %v830, %v820
        %v832 = vadd.s32 %v831, %v822
        %v833 = vmul.u32 %v788, %v779
        %v834 = vadd.s32 %v810, %v829
        %vm835 = vc.u32 %v810, %v829
        %v836 = vadd.s32 %v832, 1
        %v837 = vsel %vm835, %v836, %v832
        %v838 = vadd.s32 %v833, %v837
        %v839 = vadd.s32 %v838, 536870912
        %v840 = vshrl.u32 %v839, 30
        %v841 = vshll.u32 %v840, 30
        %v842 = vsub.s32 %v838, %v841
        %vm843 = vcmp.lt.s32.totalorder %v842, 0
        %v844 = vsub.s32 0, %v842
        %v845 = vsel %vm843, %v844, %v842
        %v846 = vclz %v845
        %v847 = vsub.s32 %v846, 2
        %vm848 = vcmp.gt.s32.totalorder 0, %v847
        %v849 = vsel %vm848, 0, %v847
        %v850 = vsub.s32 32, %v849
        %v851 = vshll.u32 %v842, %v849
        %v852 = vshrl.u32 %v834, %v850
        %v853 = vor.u32 %v851, %v852
        %v854 = vsub.s32 4294967266, %v849
        %v855 = vadd.s32 %v854, 127
        %v856 = vshll.u32 %v855, 23
        %v857 = vor.u32 4788187, %v856
        %v858 = vand.u32 2147483647, %v857
        %v860 = vcvt.s32.f32 %v853
        %v861 = vmul.f32 %v860, %v858
        %v862 = vxor.u32 %v861, 2147483648
        %v863 = vsel %vm742, %v862, %v861
        %v864 = vsub.s32 4, %v840
        %v865 = vsel %vm742, %v864, %v840
        %v866 = vsel %vm741, %v261, %v863
        %v867 = vsel %vm741, 0, %v865
        %v868 = vmul.f32 %v866, %v866
        %v869 = vmul.f32 %v868, -0.001358992
        %v870 = vadd.f32 %v869, 0.041655596
        %v871 = vmul.f32 %v868, %v870
        %v872 = vadd.f32 %v871, -0.4999988
        %v873 = vmul.f32 %v868, %v872
        %v874 = vadd.f32 1.0, %v873
        %v875 = vmul.f32 %v866, %v866
        %v876 = vmul.f32 %v875, -0.00019511016
        %v877 = vadd.f32 %v876, 0.008332121
        %v878 = vmul.f32 %v875, %v877
        %v879 = vadd.f32 %v878, -0.16666654
        %v880 = vmul.f32 %v875, %v879
        %v881 = vadd.f32 %v880, 1.0
        %v882 = vmul.f32 %v881, %v866
        %vm883 = vweird.f32 %v261
        %v884 = vadd.s32 %v867, 3
        %v885 = vand.u32 %v884, 3
        %vm886 = vcmp.lt.s32.totalorder %v885, 2
        %vm887 = vcmp.eq.s32.totalorder %v885, 0
        %v888 = vxor.u32 %v882, 2147483648
        %v889 = vsel %vm887, %v874, %v888
        %vm890 = vcmp.eq.s32.totalorder %v885, 2
        %v891 = vxor.u32 %v874, 2147483648
        %v892 = vsel %vm890, %v891, %v882
        %v893 = vsel %vm886, %v889, %v892
        %v894 = vsel %vm883, nan, %v893
        %v895 = vand.u32 2147483647, %v264
        %vm896 = vcmp.le.f32.partialorder %v895, 0.7853982
        %vm897 = vcmp.lt.s32.totalorder %v264, 0
        %v898 = vand.u32 %v264, 2139095040
        %v899 = vshrl.u32 %v898, 23
        %v900 = vsub.s32 %v899, 127
        %v901 = vand.u32 2147483647, %v264
        %v902 = vand.u32 %v901, 8388607
        %v903 = vor.u32 %v902, 8388608
        %v904 = vsub.s32 0, %v903
        %v905 = vadd.s32 %v900, 1
        %vm906 = vcmp.gt.s32.totalorder %v905, 0
        %v907 = vsel %vm906, %v905, 0
        %v908 = vshrl.u32 %v907, 5
        %v909 = vand.u32 %v907, 31
        %v910 = vsub.s32 32, %v909
        %v911 = vshrl.u32 683565275, %v910
        %v912 = vshll.u32 683565275, %v909
        %v913 = vshrl.u32 2475754826, %v910
        %v914 = vor.u32 %v912, %v913
        %v915 = vshll.u32 2475754826, %v909
        %v916 = vshrl.u32 2131351028, %v910
        %v917 = vor.u32 %v915, %v916
        %v918 = vshll.u32 2131351028, %v909
        %v919 = vshrl.u32 2102212464, %v910
        %v920 = vor.u32 %v918, %v919
        %v921 = vshll.u32 2102212464, %v909
        %v922 = vshrl.u32 920167782, %v910
        %v923 = vor.u32 %v921, %v922
        %v924 = vshll.u32 920167782, %v909
        %v925 = vshrl.u32 1326507024, %v910
        %v926 = vor.u32 %v924, %v925
        %vm927 = vcmp.lt.s32.totalorder %v908, 1
        %vm928 = vcmp.lt.s32.totalorder %v908, 2
        %vm929 = vcmp.lt.s32.totalorder %v908, 3
        %vm930 = vcmp.lt.s32.totalorder %v908, 4
        %v931 = vsel %vm927, %v911, %v914
        %v932 = vsel %vm930, %v920, 2102212464
        %v933 = vsel %vm929, %v917, %v932
        %v934 = vsel %vm928, %v931, %v933
        %v935 = vsel %vm927, %v914, %v917
        %v936 = vsel %vm930, %v923, 920167782
        %v937 = vsel %vm929, %v920, %v936
        %v938 = vsel %vm928, %v935, %v937
        %v939 = vsel %vm927, %v917, %v920
        %v940 = vsel %vm930, %v926, 1326507024
        %v941 = vsel %vm929, %v923, %v940
        %v942 = vsel %vm928, %v939, %v941
        %v943 = vshll.u32 %v903, 8
        %v944 = vand.u32 %v943, 65535
        %v945 = vshrl.u32 %v943, 16
        %v946 = vand.u32 %v942, 65535
        %v947 = vshrl.u32 %v942, 16
        %v948 = vmul.u32 %v944, %v946
        %v949 = vmul.u32 %v944, %v947
        %v950 = vmul.u32 %v945, %v946
        %v951 = vmul.u32 %v945, %v947
        %v952 = vshll.u32 %v949, 16
        %v953 = vshrl.u32 %v949, 16
        %v954 = vshll.u32 %v950, 16
        %v955 = vshrl.u32 %v950, 16
        %vm956 = vc.u32 %v948, %v952
        %v957 = vsel %vm956, 1, 0
        %v958 = vadd.s32 %v948, %v952
        %v959 = vadd.s32 %v951, %v957
        %vm960 = vc.u32 %v958, %v954
        %v961 = vsel %vm960, 1, 0
        %v962 = vadd.s32 %v958, %v954
        %v963 = vadd.s32 %v959, %v961
        %v964 = vadd.s32 %v963, %v953
        %v965 = vadd.s32 %v964, %v955
        %v966 = vand.u32 %v943, 65535
        %v967 = vshrl.u32 %v943, 16
        %v968 = vand.u32 %v938, 65535
        %v969 = vshrl.u32 %v938, 16
        %v970 = vmul.u32 %v966, %v968
        %v971 = vmul.u32 %v966, %v969
        %v972 = vmul.u32 %v967, %v968
        %v973 = vmul.u32 %v967, %v969
        %v974 = vshll.u32 %v971, 16
        %v975 = vshrl.u32 %v971, 16
        %v976 = vshll.u32 %v972, 16
        %v977 = vshrl.u32 %v972, 16
        %vm978 = vc.u32 %v970, %v974
        %v979 = vsel %vm978, 1, 0
        %v980 = vadd.s32 %v970, %v974
        %v981 = vadd.s32 %v973, %v979
        %vm982 = vc.u32 %v980, %v976
        %v983 = vsel %vm982, 1, 0
        %v984 = vadd.s32 %v980, %v976
        %v985 = vadd.s32 %v981, %v983
        %v986 = vadd.s32 %v985, %v975
        %v987 = vadd.s32 %v986, %v977
        %v988 = vmul.u32 %v943, %v934
        %v989 = vadd.s32 %v965, %v984
        %vm990 = vc.u32 %v965, %v984
        %v991 = vadd.s32 %v987, 1
        %v992 = vsel %vm990, %v991, %v987
        %v993 = vadd.s32 %v988, %v992
        %v994 = vadd.s32 %v993, 536870912
        %v995 = vshrl.u32 %v994, 30
        %v996 = vshll.u32 %v995, 30
        %v997 = vsub.s32 %v993, %v996
        %vm998 = vcmp.lt.s32.totalorder %v997, 0
        %v999 = vsub.s32 0, %v997
        %v1000 = vsel %vm998, %v999, %v997
        %v1001 = vclz %v1000
        %v1002 = vsub.s32 %v1001, 2
        %vm1003 = vcmp.gt.s32.totalorder 0, %v1002
        %v1004 = vsel %vm1003, 0, %v1002
        %v1005 = vsub.s32 32, %v1004
        %v1006 = vshll.u32 %v997, %v1004
        %v1007 = vshrl.u32 %v989, %v1005
        %v1008 = vor.u32 %v1006, %v1007
        %v1009 = vsub.s32 4294967266, %v1004
        %v1010 = vadd.s32 %v1009, 127
        %v1011 = vshll.u32 %v1010, 23
        %v1012 = vor.u32 4788187, %v1011
        %v1013 = vand.u32 2147483647, %v1012
        %v1015 = vcvt.s32.f32 %v1008
        %v1016 = vmul.f32 %v1015, %v1013
        %v1017 = vxor.u32 %v1016, 2147483648
        %v1018 = vsel %vm897, %v1017, %v1016
        %v1019 = vsub.s32 4, %v995
        %v1020 = vsel %vm897, %v1019, %v995
        %v1021 = vsel %vm896, %v264, %v1018
        %v1022 = vsel %vm896, 0, %v1020
        %v1023 = vmul.f32 %v1021, %v1021
        %v1024 = vmul.f32 %v1023, -0.001358992
        %v1025 = vadd.f32 %v1024, 0.041655596
        %v1026 = vmul.f32 %v1023, %v1025
        %v1027 = vadd.f32 %v1026, -0.4999988
        %v1028 = vmul.f32 %v1023, %v1027
        %v1029 = vadd.f32 1.0, %v1028
        %v1030 = vmul.f32 %v1021, %v1021
        %v1031 = vmul.f32 %v1030, -0.00019511016
        %v1032 = vadd.f32 %v1031, 0.008332121
        %v1033 = vmul.f32 %v1030, %v1032
        %v1034 = vadd.f32 %v1033, -0.16666654
        %v1035 = vmul.f32 %v1030, %v1034
        %v1036 = vadd.f32 %v1035, 1.0
        %v1037 = vmul.f32 %v1036, %v1021
        %vm1038 = vweird.f32 %v264
        %v1039 = vadd.s32 %v1022, 3
        %v1040 = vand.u32 %v1039, 3
        %vm1041 = vcmp.lt.s32.totalorder %v1040, 2
        %vm1042 = vcmp.eq.s32.totalorder %v1040, 0
        %v1043 = vxor.u32 %v1037, 2147483648
        %v1044 = vsel %vm1042, %v1029, %v1043
        %vm1045 = vcmp.eq.s32.totalorder %v1040, 2
        %v1046 = vxor.u32 %v1029, 2147483648
        %v1047 = vsel %vm1045, %v1046, %v1037
        %v1048 = vsel %vm1041, %v1044, %v1047
        %v1049 = vsel %vm1038, nan, %v1048
        %v1050 = vand.u32 2147483647, %v267
        %vm1051 = vcmp.le.f32.partialorder %v1050, 0.7853982
        %vm1052 = vcmp.lt.s32.totalorder %v267, 0
        %v1053 = vand.u32 %v267, 2139095040
        %v1054 = vshrl.u32 %v1053, 23
        %v1055 = vsub.s32 %v1054, 127
        %v1056 = vand.u32 2147483647, %v267
        %v1057 = vand.u32 %v1056, 8388607
        %v1058 = vor.u32 %v1057, 8388608
        %v1059 = vsub.s32 0, %v1058
        %v1060 = vadd.s32 %v1055, 1
        %vm1061 = vcmp.gt.s32.totalorder %v1060, 0
        %v1062 = vsel %vm1061, %v1060, 0
        %v1063 = vshrl.u32 %v1062, 5
        %v1064 = vand.u32 %v1062, 31
        %v1065 = vsub.s32 32, %v1064
        %v1066 = vshrl.u32 683565275, %v1065
        %v1067 = vshll.u32 683565275, %v1064
        %v1068 = vshrl.u32 2475754826, %v1065
        %v1069 = vor.u32 %v1067, %v1068
        %v1070 = vshll.u32 2475754826, %v1064
        %v1071 = vshrl.u32 2131351028, %v1065
        %v1072 = vor.u32 %v1070, %v1071
        %v1073 = vshll.u32 2131351028, %v1064
        %v1074 = vshrl.u32 2102212464, %v1065
        %v1075 = vor.u32 %v1073, %v1074
        %v1076 = vshll.u32 2102212464, %v1064
        %v1077 = vshrl.u32 920167782, %v1065
        %v1078 = vor.u32 %v1076, %v1077
        %v1079 = vshll.u32 920167782, %v1064
        %v1080 = vshrl.u32 1326507024, %v1065
        %v1081 = vor.u32 %v1079, %v1080
        %vm1082 = vcmp.lt.s32.totalorder %v1063, 1
        %vm1083 = vcmp.lt.s32.totalorder %v1063, 2
        %vm1084 = vcmp.lt.s32.totalorder %v1063, 3
        %vm1085 = vcmp.lt.s32.totalorder %v1063, 4
        %v1086 = vsel %vm1082, %v1066, %v1069
        %v1087 = vsel %vm1085, %v1075, 2102212464
        %v1088 = vsel %vm1084, %v1072, %v1087
        %v1089 = vsel %vm1083, %v1086, %v1088
        %v1090 = vsel %vm1082, %v1069, %v1072
        %v1091 = vsel %vm1085, %v1078, 920167782
        %v1092 = vsel %vm1084, %v1075, %v1091
        %v1093 = vsel %vm1083, %v1090, %v1092
        %v1094 = vsel %vm1082, %v1072, %v1075
        %v1095 = vsel %vm1085, %v1081, 1326507024
        %v1096 = vsel %vm1084, %v1078, %v1095
        %v1097 = vsel %vm1083, %v1094, %v1096
        %v1098 = vshll.u32 %v1058, 8
        %v1099 = vand.u32 %v1098, 65535
        %v1100 = vshrl.u32 %v1098, 16
        %v1101 = vand.u32 %v1097, 65535
        %v1102 = vshrl.u32 %v1097, 16
        %v1103 = vmul.u32 %v1099, %v1101
        %v1104 = vmul.u32 %v1099, %v1102
        %v1105 = vmul.u32 %v1100, %v1101
        %v1106 = vmul.u32 %v1100, %v1102
        %v1107 = vshll.u32 %v1104, 16
        %v1108 = vshrl.u32 %v1104, 16
        %v1109 = vshll.u32 %v1105, 16
        %v1110 = vshrl.u32 %v1105, 16
        %vm1111 = vc.u32 %v1103, %v1107
        %v1112 = vsel %vm1111, 1, 0
        %v1113 = vadd.s32 %v1103, %v1107
        %v1114 = vadd.s32 %v1106, %v1112
        %vm1115 = vc.u32 %v1113, %v1109
        %v1116 = vsel %vm1115, 1, 0
        %v1117 = vadd.s32 %v1113, %v1109
        %v1118 = vadd.s32 %v1114, %v1116
        %v1119 = vadd.s32 %v1118, %v1108
        %v1120 = vadd.s32 %v1119, %v1110
        %v1121 = vand.u32 %v1098, 65535
        %v1122 = vshrl.u32 %v1098, 16
        %v1123 = vand.u32 %v1093, 65535
        %v1124 = vshrl.u32 %v1093, 16
        %v1125 = vmul.u32 %v1121, %v1123
        %v1126 = vmul.u32 %v1121, %v1124
        %v1127 = vmul.u32 %v1122, %v1123
        %v1128 = vmul.u32 %v1122, %v1124
        %v1129 = vshll.u32 %v1126, 16
        %v1130 = vshrl.u32 %v1126, 16
        %v1131 = vshll.u32 %v1127, 16
        %v1132 = vshrl.u32 %v1127, 16
        %vm1133 = vc.u32 %v1125, %v1129
        %v1134 = vsel %vm1133, 1, 0
        %v1135 = vadd.s32 %v1125, %v1129
        %v1136 = vadd.s32 %v1128, %v1134
        %vm1137 = vc.u32 %v1135, %v1131
        %v1138 = vsel %vm1137, 1, 0
        %v1139 = vadd.s32 %v1135, %v1131
        %v1140 = vadd.s32 %v1136, %v1138
        %v1141 = vadd.s32 %v1140, %v1130
        %v1142 = vadd.s32 %v1141, %v1132
        %v1143 = vmul.u32 %v1098, %v1089
        %v1144 = vadd.s32 %v1120, %v1139
        %vm1145 = vc.u32 %v1120, %v1139
        %v1146 = vadd.s32 %v1142, 1
        %v1147 = vsel %vm1145, %v1146, %v1142
        %v1148 = vadd.s32 %v1143, %v1147
        %v1149 = vadd.s32 %v1148, 536870912
        %v1150 = vshrl.u32 %v1149, 30
        %v1151 = vshll.u32 %v1150, 30
        %v1152 = vsub.s32 %v1148, %v1151
        %vm1153 = vcmp.lt.s32.totalorder %v1152, 0
        %v1154 = vsub.s32 0, %v1152
        %v1155 = vsel %vm1153, %v1154, %v1152
        %v1156 = vclz %v1155
        %v1157 = vsub.s32 %v1156, 2
        %vm1158 = vcmp.gt.s32.totalorder 0, %v1157
        %v1159 = vsel %vm1158, 0, %v1157
        %v1160 = vsub.s32 32, %v1159
        %v1161 = vshll.u32 %v1152, %v1159
        %v1162 = vshrl.u32 %v1144, %v1160
        %v1163 = vor.u32 %v1161, %v1162
        %v1164 = vsub.s32 4294967266, %v1159
        %v1165 = vadd.s32 %v1164, 127
        %v1166 = vshll.u32 %v1165, 23
        %v1167 = vor.u32 4788187, %v1166
        %v1168 = vand.u32 2147483647, %v1167
        %v1170 = vcvt.s32.f32 %v1163
        %v1171 = vmul.f32 %v1170, %v1168
        %v1172 = vxor.u32 %v1171, 2147483648
        %v1173 = vsel %vm1052, %v1172, %v1171
        %v1174 = vsub.s32 4, %v1150
        %v1175 = vsel %vm1052, %v1174, %v1150
        %v1176 = vsel %vm1051, %v267, %v1173
        %v1177 = vsel %vm1051, 0, %v1175
        %v1178 = vmul.f32 %v1176, %v1176
        %v1179 = vmul.f32 %v1178, -0.001358992
        %v1180 = vadd.f32 %v1179, 0.041655596
        %v1181 = vmul.f32 %v1178, %v1180
        %v1182 = vadd.f32 %v1181, -0.4999988
        %v1183 = vmul.f32 %v1178, %v1182
        %v1184 = vadd.f32 1.0, %v1183
        %v1185 = vmul.f32 %v1176, %v1176
        %v1186 = vmul.f32 %v1185, -0.00019511016
        %v1187 = vadd.f32 %v1186, 0.008332121
        %v1188 = vmul.f32 %v1185, %v1187
        %v1189 = vadd.f32 %v1188, -0.16666654
        %v1190 = vmul.f32 %v1185, %v1189
        %v1191 = vadd.f32 %v1190, 1.0
        %v1192 = vmul.f32 %v1191, %v1176
        %vm1193 = vweird.f32 %v267
        %v1194 = vadd.s32 %v1177, 3
        %v1195 = vand.u32 %v1194, 3
        %vm1196 = vcmp.lt.s32.totalorder %v1195, 2
        %vm1197 = vcmp.eq.s32.totalorder %v1195, 0
        %v1198 = vxor.u32 %v1192, 2147483648
        %v1199 = vsel %vm1197, %v1184, %v1198
        %vm1200 = vcmp.eq.s32.totalorder %v1195, 2
        %v1201 = vxor.u32 %v1184, 2147483648
        %v1202 = vsel %vm1200, %v1201, %v1192
        %v1203 = vsel %vm1196, %v1199, %v1202
        %v1204 = vsel %vm1193, nan, %v1203
        %v1205 = vadd.f32 %v269, %v429
        %v1206 = vadd.f32 %v270, %v584
        %v1207 = vadd.f32 %v271, %v739
        %v1208 = vadd.f32 %v272, %v894
        %v1209 = vadd.f32 %v273, %v1049
        %v1210 = vadd.f32 %v274, %v1204
        %1211 = vst [vmem:[%s203] sm:$0xff] %v1205
        %1212 = vst [vmem:[%s203 + $0x8] sm:$0xff] %v1206
        %1213 = vst [vmem:[%s203 + $0x10] sm:$0xff] %v1207
        %1214 = vst [vmem:[%s203 + $0x18] sm:$0xff] %v1208
        %1215 = vst [vmem:[%s203 + $0x20] sm:$0xff] %v1209
        %1216 = vst [vmem:[%s203 + $0x28] sm:$0xff] %v1210
        %s1217 = sand.u32 %s101, 1
        %s1218 = scalar_lea.sflag [#allocation4], %s1217
        %s1219 = sand.u32 %s101, 1
        %s1220 = smul.addr %s1219, 48
        %s1221 = scalar_lea.vmem [#allocation5], %s1220
        // Predicated region
        $region37: #{tpu_custom_call.1} parent=31 // pred_check
          %p1222 = pneg %p111
        $region38: #{tpu_custom_call.1} parent=31 // pred_check_branch
          %1224 = sbr.rel (%p1222) target = $region40
        $region39: #{tpu_custom_call.1} parent=31 // pred_region
          %1226 = vsyncadd %s1218, 0
          %s1227 = smul.addr %s20, 6
          %s1228 = smul.addr %s1227, 8
          %s1229 = scalar_lea.hbm %s3, %s1228
          %s1230 = sshll.u32 %s1221, 4
          %s1231 = int_to_ptr.vmem [resolvable:$true] %s1230
          %s1232 = sshll.u32 %s1229, 4
          %s1233 = int_to_ptr.hbm [resolvable:$true] %s1232
          %1238 = dma.vmem_to_hbm [thread:$0]  %s1231, 768, %s1233, %s1218, 128, 128, 8
        $region40: #{tpu_custom_call.1} parent=31 // pred_fallthru
          _
      $region32: #{tpu_custom_call.1} parent=5 // pred_fallthru
        _
      %p1239 = scmp.le.s32.totalorder 2, %s15
      // Predicated region
      $region41: #{tpu_custom_call.1} parent=5 // pred_check
        %p1240 = pneg %p1239
      $region42: #{tpu_custom_call.1} parent=5 // pred_check_branch
        %1242 = sbr.rel (%p1240) target = $region44
      $region43: #{tpu_custom_call.1} parent=5 // pred_region
        %s1243 = ssub.s32 %s15, 2
        // Predicated region
        $region45: #{tpu_custom_call.1} parent=43 // pred_check
          %p1244 = pneg %p117
        $region46: #{tpu_custom_call.1} parent=43 // pred_check_branch
          %1246 = sbr.rel (%p1244) target = $region48
        $region47: #{tpu_custom_call.1} parent=43 // pred_region
          %s1247 = sand.u32 %s102, 1
          %s1248 = scalar_lea.sflag [#allocation4], %s1247
          %s1249 = sand.u32 %s102, 1
          %s1250 = smul.addr %s1249, 48
          %s1251 = scalar_lea.vmem [#allocation5], %s1250
          %1253 = dma.done %s1248, 768
        $region48: #{tpu_custom_call.1} parent=43 // pred_fallthru
          _
      $region44: #{tpu_custom_call.1} parent=5 // pred_fallthru
        _
    $region6: #{tpu_custom_call.1} parent=1 // loop_footer
      %s19 = sadd.s32 1, %s15
    $region7: #{tpu_custom_call.1} parent=1 // loop_footer_branch
      %14 = sbr.rel target = $region3
    $region8: #{tpu_custom_call.1} parent=1 // loop_exit
      _
    %1254 = vsyncpa [#allocation3], 1
    %s1255 = scalar_lea.sflag [#allocation3], 1
    %1256 = vsyncpa %s1255, 1
    %1257 = vsyncpa [#allocation4], 1
    %s1258 = scalar_lea.sflag [#allocation4], 1
    %1259 = vsyncpa %s1258, 1

</llo_original>
